<compile_context>
chip_gen: v7x
topology: tpu7x:2x2x1
jax: 0.10.0
libtpu: 0.0.40
codegen_flags: <defaults>
</compile_context>

<pallas_src>
import jax
import jax.numpy as jnp
from jax.experimental import pallas as pl
from jax.experimental.pallas import tpu as pltpu

EMBED_DIM = 300
HIDDEN = 10
NUM_CLASSES = 2


def _fasttext_kernel(x_ref, w1_ref, b1_ref, w2t_ref, b2_ref, o_ref):
    """One batch tile of the forward pass.

    x_ref  : (BT, S, D) f32   word embeddings (streamed, no pre-padding)
    w1_ref : (D, H) f32       first Linear weight (in, out), pre-scaled by 1/S
    b1_ref : (1, H) f32
    w2t_ref: (C, H) f32       second Linear weight, transposed
    b2_ref : (1, C) f32
    o_ref  : (BT, C) f32      logits
    """
    S = x_ref.shape[1]

    # Word pooling: accumulate per-word slices so we never materialize a full
    # (BT, S, D) temporary.  The 1/S of the mean is folded into w1.
    pooled = x_ref[:, 0, :]                           # (BT, D) f32
    for s in range(1, S):                             # static unroll, VPU adds
        pooled = pooled + x_ref[:, s, :]

    # Linear(300, 10) on the MXU with f32 accumulation, ReLU on the VPU.
    h = jnp.dot(pooled, w1_ref[...], preferred_element_type=jnp.float32)
    h = jnp.maximum(h + b1_ref[...], 0.0)             # (BT, H)

    # Linear(10, 2): K=10, N=2 would waste a full MXU pass; do it as
    # broadcast-multiply (VPU) + lane reduce (XLU), one static-sliced store
    # per logit column (avoids a concatenate relayout in the epilogue).
    w2t = w2t_ref[...]                                # (C, H)
    b2 = b2_ref[...]                                  # (1, C)
    for c in range(w2t_ref.shape[0]):                 # static C = 2
        wc = w2t[c:c + 1, :]                          # (1, H) static slice
        col = jnp.sum(h * wc, axis=-1, keepdims=True) + b2[:, c:c + 1]
        o_ref[:, c:c + 1] = col.astype(o_ref.dtype)


def _choose_batch_tile(B, S, D, *, x_vmem_budget_bytes=32 << 20, min_steps=8):
    """Pick the batch tile.

    Sized so the double-buffered f32 x tile (with Mosaic's internal lane
    padding to a multiple of 128) fits the VMEM budget, while keeping at
    least `min_steps` grid steps (when B allows) so both v7x TensorCores get
    work and the pipeline has enough steps to hide DMA.
    """
    d_lanes = pl.cdiv(D, 128) * 128                   # VMEM lane footprint
    per_row_bytes = S * d_lanes * 4                   # f32 bytes / batch row
    bt_vmem = max(8, (x_vmem_budget_bytes // (2 * per_row_bytes)) // 8 * 8)
    bt_steps = max(8, ((pl.cdiv(B, min_steps) + 7) // 8) * 8)
    bt = min(bt_vmem, bt_steps)
    return max(1, min(B, bt))


def fasttext_classifier_forward(x_emb, w1, b1, w2, b2, *, batch_tile=None):
    """x_emb: (B, S, D) f32 word embeddings.  w1:(D,H), b1:(1,H), w2:(H,C),
    b2:(1,C) (nn.Linear weights stored as (in, out)).  Returns (B,C) logits."""
    B, S, D = x_emb.shape
    H = w1.shape[1]
    C = w2.shape[1]

    # Weights are tiny; prep them on the host.  x is streamed untouched
    # (no cast, no pad) -- it is the only HBM-bandwidth-relevant input.
    x_f32 = x_emb.astype(jnp.float32)                 # no-op for f32 inputs
    w1_p = w1.astype(jnp.float32) / S                 # fold the mean's 1/S
    b1_p = b1.astype(jnp.float32).reshape(1, H)
    w2_t = w2.astype(jnp.float32).T                   # (C, H)
    b2_p = b2.astype(jnp.float32).reshape(1, C)

    bt = batch_tile if batch_tile is not None else _choose_batch_tile(B, S, D)
    bt = max(1, min(B, bt))
    grid = (pl.cdiv(B, bt),)

    return pl.pallas_call(
        _fasttext_kernel,
        out_shape=jax.ShapeDtypeStruct((B, C), jnp.float32),
        grid=grid,
        in_specs=[
            # Streamed x: last dim equals the full array dim (300), so the
            # (8,128) rule is satisfied without pre-padding.
            pl.BlockSpec((bt, S, D), lambda i: (i, 0, 0)),
            pl.BlockSpec((D, H), lambda i: (0, 0)),   # resident w1 (scaled)
            pl.BlockSpec((1, H), lambda i: (0, 0)),   # resident b1
            pl.BlockSpec((C, H), lambda i: (0, 0)),   # resident w2^T
            pl.BlockSpec((1, C), lambda i: (0, 0)),   # resident b2
        ],
        out_specs=pl.BlockSpec((bt, C), lambda i: (i, 0)),
        compiler_params=pltpu.CompilerParams(
            dimension_semantics=("parallel",),        # v7x: batch over 2 TCs
            vmem_limit_bytes=48 << 20,                # < v7x 64 MiB physical
        ),
    )(x_f32, w1_p, b1_p, w2_t, b2_p)


def _reference_forward(x_emb_f32, w1, b1, w2, b2):
    mean_emb = jnp.mean(x_emb_f32, axis=1)
    h = jnp.maximum(mean_emb @ w1 + b1, 0.0)
    return h @ w2 + b2


if __name__ == "__main__":
    key = jax.random.PRNGKey(0)
    k_x, k_w1, k_b1, k_w2, k_b2 = jax.random.split(key, 5)

    # Synthetic inputs: batch of 2 "sentences", each 8 words, FastText dim 300.
    B, S = 2, 8
    x_emb = jax.random.normal(k_x, (B, S, EMBED_DIM), dtype=jnp.float32)

    # Deterministic parameter init (nn.Linear-style uniform bounds).
    lim1 = 1.0 / (EMBED_DIM ** 0.5)
    lim2 = 1.0 / (HIDDEN ** 0.5)
    w1 = jax.random.uniform(k_w1, (EMBED_DIM, HIDDEN), jnp.float32, -lim1, lim1)
    b1 = jax.random.uniform(k_b1, (1, HIDDEN), jnp.float32, -lim1, lim1)
    w2 = jax.random.uniform(k_w2, (HIDDEN, NUM_CLASSES), jnp.float32, -lim2, lim2)
    b2 = jax.random.uniform(k_b2, (1, NUM_CLASSES), jnp.float32, -lim2, lim2)

    y = fasttext_classifier_forward(x_emb, w1, b1, w2, b2)
    y = jax.block_until_ready(y)

    # Full-f32 reference (no quantization anywhere in the kernel path now).
    # Note: folding 1/S into w1 is bit-exact here because S=8 is a power of
    # two; for general S it differs at the last ulp only.
    y_ref = _reference_forward(x_emb, w1, b1, w2, b2)

    assert y.shape == (B, NUM_CLASSES)
    assert jnp.allclose(y, y_ref, atol=1e-4, rtol=1e-4), "mismatch vs reference"

    # TODO(synk): FastText string tokenization / subword hashing has no Pallas
    # equivalent; word embeddings are provided as a dense (B, S, 300) input.
    print("KERNEL_OK")
</pallas_src>

<mosaic_0001>
module attributes {stable_mosaic.version = 11 : i64} {
  func.func @_fasttext_kernel(%arg0: i32, %arg1: memref<2x8x300xf32, #tpu.memory_space<vmem>>, %arg2: memref<300x10xf32, #tpu.memory_space<vmem>>, %arg3: memref<1x10xf32, #tpu.memory_space<vmem>>, %arg4: memref<2x10xf32, #tpu.memory_space<vmem>>, %arg5: memref<1x2xf32, #tpu.memory_space<vmem>>, %arg6: memref<2x2xf32, #tpu.memory_space<vmem>>) attributes {dimension_semantics = [#tpu.dimension_semantics<parallel>], iteration_bounds = array<i64: 1>, scalar_prefetch = 0 : i64, scratch_operands = 0 : i64, tpu.core_type = #tpu.core_type<tc>, window_params = [{transform_indices = @transform_0, window_bounds = array<i64: 2, 8, 300>}, {pipeline_mode = #tpu.pipeline_mode<synchronous>, transform_indices = @transform_1, window_bounds = array<i64: 300, 10>}, {pipeline_mode = #tpu.pipeline_mode<synchronous>, transform_indices = @transform_2, window_bounds = array<i64: 1, 10>}, {pipeline_mode = #tpu.pipeline_mode<synchronous>, transform_indices = @transform_3, window_bounds = array<i64: 2, 10>}, {pipeline_mode = #tpu.pipeline_mode<synchronous>, transform_indices = @transform_4, window_bounds = array<i64: 1, 2>}, {transform_indices = @transform_5, window_bounds = array<i64: 2, 2>}]} {
    %c0 = arith.constant 0 : index
    %c0_0 = arith.constant 0 : index
    %c0_1 = arith.constant 0 : index
    %0 = vector.load %arg1[%c0, %c0_0, %c0_1] : memref<2x8x300xf32, #tpu.memory_space<vmem>>, vector<2x1x300xf32>
    %1 = vector.shape_cast %0 : vector<2x1x300xf32> to vector<2x300xf32>
    %c0_2 = arith.constant 0 : index
    %c1 = arith.constant 1 : index
    %c0_3 = arith.constant 0 : index
    %2 = vector.load %arg1[%c0_2, %c1, %c0_3] : memref<2x8x300xf32, #tpu.memory_space<vmem>>, vector<2x1x300xf32>
    %3 = vector.shape_cast %2 : vector<2x1x300xf32> to vector<2x300xf32>
    %4 = arith.addf %1, %3 : vector<2x300xf32>
    %c0_4 = arith.constant 0 : index
    %c2 = arith.constant 2 : index
    %c0_5 = arith.constant 0 : index
    %5 = vector.load %arg1[%c0_4, %c2, %c0_5] : memref<2x8x300xf32, #tpu.memory_space<vmem>>, vector<2x1x300xf32>
    %6 = vector.shape_cast %5 : vector<2x1x300xf32> to vector<2x300xf32>
    %7 = arith.addf %4, %6 : vector<2x300xf32>
    %c0_6 = arith.constant 0 : index
    %c3 = arith.constant 3 : index
    %c0_7 = arith.constant 0 : index
    %8 = vector.load %arg1[%c0_6, %c3, %c0_7] : memref<2x8x300xf32, #tpu.memory_space<vmem>>, vector<2x1x300xf32>
    %9 = vector.shape_cast %8 : vector<2x1x300xf32> to vector<2x300xf32>
    %10 = arith.addf %7, %9 : vector<2x300xf32>
    %c0_8 = arith.constant 0 : index
    %c4 = arith.constant 4 : index
    %c0_9 = arith.constant 0 : index
    %11 = vector.load %arg1[%c0_8, %c4, %c0_9] : memref<2x8x300xf32, #tpu.memory_space<vmem>>, vector<2x1x300xf32>
    %12 = vector.shape_cast %11 : vector<2x1x300xf32> to vector<2x300xf32>
    %13 = arith.addf %10, %12 : vector<2x300xf32>
    %c0_10 = arith.constant 0 : index
    %c5 = arith.constant 5 : index
    %c0_11 = arith.constant 0 : index
    %14 = vector.load %arg1[%c0_10, %c5, %c0_11] : memref<2x8x300xf32, #tpu.memory_space<vmem>>, vector<2x1x300xf32>
    %15 = vector.shape_cast %14 : vector<2x1x300xf32> to vector<2x300xf32>
    %16 = arith.addf %13, %15 : vector<2x300xf32>
    %c0_12 = arith.constant 0 : index
    %c6 = arith.constant 6 : index
    %c0_13 = arith.constant 0 : index
    %17 = vector.load %arg1[%c0_12, %c6, %c0_13] : memref<2x8x300xf32, #tpu.memory_space<vmem>>, vector<2x1x300xf32>
    %18 = vector.shape_cast %17 : vector<2x1x300xf32> to vector<2x300xf32>
    %19 = arith.addf %16, %18 : vector<2x300xf32>
    %c0_14 = arith.constant 0 : index
    %c7 = arith.constant 7 : index
    %c0_15 = arith.constant 0 : index
    %20 = vector.load %arg1[%c0_14, %c7, %c0_15] : memref<2x8x300xf32, #tpu.memory_space<vmem>>, vector<2x1x300xf32>
    %21 = vector.shape_cast %20 : vector<2x1x300xf32> to vector<2x300xf32>
    %22 = arith.addf %19, %21 : vector<2x300xf32>
    %c0_16 = arith.constant 0 : index
    %c0_17 = arith.constant 0 : index
    %23 = vector.load %arg2[%c0_16, %c0_17] : memref<300x10xf32, #tpu.memory_space<vmem>>, vector<300x10xf32>
    %cst = arith.constant dense<0.000000e+00> : vector<2x10xf32>
    %24 = tpu.matmul %22, %23, %cst {dimension_numbers = #tpu.dot_dimension_numbers<[1], [0], [0], [1], [0, 0, 1, 1], [], []>} : vector<2x300xf32>, vector<300x10xf32>, vector<2x10xf32> -> vector<2x10xf32>
    %c0_18 = arith.constant 0 : index
    %c0_19 = arith.constant 0 : index
    %25 = vector.load %arg3[%c0_18, %c0_19] : memref<1x10xf32, #tpu.memory_space<vmem>>, vector<1x10xf32>
    %26 = vector.broadcast %25 : vector<1x10xf32> to vector<2x10xf32>
    %27 = arith.addf %24, %26 : vector<2x10xf32>
    %cst_20 = arith.constant 0.000000e+00 : f32
    %28 = vector.broadcast %cst_20 : f32 to vector<2x10xf32>
    %29 = arith.maximumf %27, %28 : vector<2x10xf32>
    %c0_21 = arith.constant 0 : index
    %c0_22 = arith.constant 0 : index
    %30 = vector.load %arg4[%c0_21, %c0_22] : memref<2x10xf32, #tpu.memory_space<vmem>>, vector<2x10xf32>
    %c0_23 = arith.constant 0 : index
    %c0_24 = arith.constant 0 : index
    %31 = vector.load %arg5[%c0_23, %c0_24] : memref<1x2xf32, #tpu.memory_space<vmem>>, vector<1x2xf32>
    %32 = vector.extract_strided_slice %30 {offsets = [0, 0], sizes = [1, 10], strides = [1, 1]} : vector<2x10xf32> to vector<1x10xf32>
    %33 = vector.broadcast %32 : vector<1x10xf32> to vector<2x10xf32>
    %34 = arith.mulf %29, %33 : vector<2x10xf32>
    %cst_25 = arith.constant dense<0.000000e+00> : vector<2xf32>
    %35 = vector.multi_reduction <add>, %34, %cst_25 [1] : vector<2x10xf32> to vector<2xf32>
    %36 = vector.shape_cast %35 : vector<2xf32> to vector<2x1xf32>
    %37 = vector.extract_strided_slice %31 {offsets = [0, 0], sizes = [1, 1], strides = [1, 1]} : vector<1x2xf32> to vector<1x1xf32>
    %38 = vector.broadcast %37 : vector<1x1xf32> to vector<2x1xf32>
    %39 = arith.addf %36, %38 : vector<2x1xf32>
    %c0_26 = arith.constant 0 : index
    %c0_27 = arith.constant 0 : index
    %40 = vector.load %arg6[%c0_26, %c0_27] : memref<2x2xf32, #tpu.memory_space<vmem>>, vector<2x1xf32>
    tpu.vector_store %arg6[%c0_26, %c0_27], %39 {strides = array<i32>} : memref<2x2xf32, #tpu.memory_space<vmem>>, vector<2x1xf32>,
    %41 = vector.extract_strided_slice %30 {offsets = [1, 0], sizes = [1, 10], strides = [1, 1]} : vector<2x10xf32> to vector<1x10xf32>
    %42 = vector.broadcast %41 : vector<1x10xf32> to vector<2x10xf32>
    %43 = arith.mulf %29, %42 : vector<2x10xf32>
    %cst_28 = arith.constant dense<0.000000e+00> : vector<2xf32>
    %44 = vector.multi_reduction <add>, %43, %cst_28 [1] : vector<2x10xf32> to vector<2xf32>
    %45 = vector.shape_cast %44 : vector<2xf32> to vector<2x1xf32>
    %46 = vector.extract_strided_slice %31 {offsets = [0, 1], sizes = [1, 1], strides = [1, 1]} : vector<1x2xf32> to vector<1x1xf32>
    %47 = vector.broadcast %46 : vector<1x1xf32> to vector<2x1xf32>
    %48 = arith.addf %45, %47 : vector<2x1xf32>
    %c0_29 = arith.constant 0 : index
    %c1_30 = arith.constant 1 : index
    %49 = vector.load %arg6[%c0_29, %c1_30] : memref<2x2xf32, #tpu.memory_space<vmem>>, vector<2x1xf32>
    tpu.vector_store %arg6[%c0_29, %c1_30], %48 {strides = array<i32>} : memref<2x2xf32, #tpu.memory_space<vmem>>, vector<2x1xf32>,
    return
  }
  func.func @transform_0(%arg0: i32) -> (i32, i32, i32) {
    %c0_i32 = arith.constant 0 : i32
    %c0_i32_0 = arith.constant 0 : i32
    %c0_i32_1 = arith.constant 0 : i32
    return %arg0, %c0_i32, %c0_i32_0 : i32, i32, i32
  }
  func.func @transform_1(%arg0: i32) -> (i32, i32) {
    %c0_i32 = arith.constant 0 : i32
    %c0_i32_0 = arith.constant 0 : i32
    %c0_i32_1 = arith.constant 0 : i32
    return %c0_i32, %c0_i32_0 : i32, i32
  }
  func.func @transform_2(%arg0: i32) -> (i32, i32) {
    %c0_i32 = arith.constant 0 : i32
    %c0_i32_0 = arith.constant 0 : i32
    %c0_i32_1 = arith.constant 0 : i32
    return %c0_i32, %c0_i32_0 : i32, i32
  }
  func.func @transform_3(%arg0: i32) -> (i32, i32) {
    %c0_i32 = arith.constant 0 : i32
    %c0_i32_0 = arith.constant 0 : i32
    %c0_i32_1 = arith.constant 0 : i32
    return %c0_i32, %c0_i32_0 : i32, i32
  }
  func.func @transform_4(%arg0: i32) -> (i32, i32) {
    %c0_i32 = arith.constant 0 : i32
    %c0_i32_0 = arith.constant 0 : i32
    %c0_i32_1 = arith.constant 0 : i32
    return %c0_i32, %c0_i32_0 : i32, i32
  }
  func.func @transform_5(%arg0: i32) -> (i32, i32) {
    %c0_i32 = arith.constant 0 : i32
    %c0_i32_0 = arith.constant 0 : i32
    return %arg0, %c0_i32 : i32, i32
  }
}

</mosaic_0001>

<llo_original>
// kernel: tpu_custom_call.1
$region0: #{tpu_custom_call.1}
  #allocation0 [shape = 'u32[]', space=smem, size = 0x4, offset = 0x4, fixed_abs, tag = 'smem constant byte address 0x4 - core index']
  #allocation1 [shape = 'u32[144,128]{1,0:T(1,128)}', space=vmem, size = 0x12000, scoped, tag = 'internal scratch']
  %s0 = inlined_call_operand.vmem [shape: f32[2,8,300], index: 0, kind: input, shape index: {}]
  %s1 = inlined_call_operand.vmem [shape: f32[300,10], index: 1, kind: input, shape index: {}]
  %s2 = inlined_call_operand.vmem [shape: f32[1,10], index: 2, kind: input, shape index: {}]
  %s3 = inlined_call_operand.vmem [shape: f32[2,10], index: 3, kind: input, shape index: {}]
  %s4 = inlined_call_operand.vmem [shape: f32[1,2], index: 4, kind: input, shape index: {}]
  %s5 = inlined_call_operand.hbm [shape: f32[2,2], index: 5, kind: output, shape index: {}]
  %s6 = sld [smem:[#allocation0]]
  $region30: #{tpu_custom_call.1} parent=0
    _
  %s8 = ssub.s32 1, %s6
  %s9 = scalar_select 0, %s8, %s6
  $region1: #{tpu_custom_call.1} parent=0
    #allocation2 [shape = 'u8[1024]{0}', space=vmem, size = 0x400, scoped, tag = 'output window, operand 0, single buffered']
    #allocation3 [shape = 's32[1]{0}', space=sflag, size = 0x4, scoped, tag = 'scoped memory for tpu_custom_call.1']
    %10 = vsyncpa [#allocation3], 0
    // Predicated region
    $region2: #{tpu_custom_call.1} parent=1 // pred_check
      _
    $region3: #{tpu_custom_call.1} parent=1 // pred_check_branch
      %12 = sbr.rel (0) target = $region5
    $region4: #{tpu_custom_call.1} parent=1 // pred_region
      _
    $region5: #{tpu_custom_call.1} parent=1 // pred_fallthru
      _
    // Predicated region
    $region6: #{tpu_custom_call.1} parent=1 // pred_check
      _
    $region7: #{tpu_custom_call.1} parent=1 // pred_check_branch
      %14 = sbr.rel (0) target = $region9
    $region8: #{tpu_custom_call.1} parent=1 // pred_region
      _
    $region9: #{tpu_custom_call.1} parent=1 // pred_fallthru
      _
    // Predicated region
    $region10: #{tpu_custom_call.1} parent=1 // pred_check
      _
    $region11: #{tpu_custom_call.1} parent=1 // pred_check_branch
      %16 = sbr.rel (0) target = $region13
    $region12: #{tpu_custom_call.1} parent=1 // pred_region
      _
    $region13: #{tpu_custom_call.1} parent=1 // pred_fallthru
      _
    // Predicated region
    $region14: #{tpu_custom_call.1} parent=1 // pred_check
      _
    $region15: #{tpu_custom_call.1} parent=1 // pred_check_branch
      %18 = sbr.rel (0) target = $region17
    $region16: #{tpu_custom_call.1} parent=1 // pred_region
      _
    $region17: #{tpu_custom_call.1} parent=1 // pred_fallthru
      _
    // Predicated region
    $region18: #{tpu_custom_call.1} parent=1 // pred_check
      _
    $region19: #{tpu_custom_call.1} parent=1 // pred_check_branch
      %20 = sbr.rel (0) target = $region21
    $region20: #{tpu_custom_call.1} parent=1 // pred_region
      _
    $region21: #{tpu_custom_call.1} parent=1 // pred_fallthru
      _
    %v21 = vld [vmem:[%s0] ss:$8 sm:$0x7]
    %s22 = scalar_lea.vmem %s0, 24
    %v23 = vld [vmem:[%s22] ss:$8 sm:$0x7]
    %s24 = scalar_lea.vmem %s0, 1
    %v25 = vld [vmem:[%s24] ss:$8 sm:$0x7]
    %s26 = scalar_lea.vmem %s0, 25
    %v27 = vld [vmem:[%s26] ss:$8 sm:$0x7]
    %v28 = vadd.f32 %v21, %v25
    %v29 = vadd.f32 %v23, %v27
    %s30 = scalar_lea.vmem %s0, 2
    %v31 = vld [vmem:[%s30] ss:$8 sm:$0x7]
    %s32 = scalar_lea.vmem %s0, 26
    %v33 = vld [vmem:[%s32] ss:$8 sm:$0x7]
    %v34 = vadd.f32 %v28, %v31
    %v35 = vadd.f32 %v29, %v33
    %s36 = scalar_lea.vmem %s0, 3
    %v37 = vld [vmem:[%s36] ss:$8 sm:$0x7]
    %s38 = scalar_lea.vmem %s0, 27
    %v39 = vld [vmem:[%s38] ss:$8 sm:$0x7]
    %v40 = vadd.f32 %v34, %v37
    %v41 = vadd.f32 %v35, %v39
    %s42 = scalar_lea.vmem %s0, 4
    %v43 = vld [vmem:[%s42] ss:$8 sm:$0x7]
    %s44 = scalar_lea.vmem %s0, 28
    %v45 = vld [vmem:[%s44] ss:$8 sm:$0x7]
    %v46 = vadd.f32 %v40, %v43
    %v47 = vadd.f32 %v41, %v45
    %s48 = scalar_lea.vmem %s0, 5
    %v49 = vld [vmem:[%s48] ss:$8 sm:$0x7]
    %s50 = scalar_lea.vmem %s0, 29
    %v51 = vld [vmem:[%s50] ss:$8 sm:$0x7]
    %v52 = vadd.f32 %v46, %v49
    %v53 = vadd.f32 %v47, %v51
    %s54 = scalar_lea.vmem %s0, 6
    %v55 = vld [vmem:[%s54] ss:$8 sm:$0x7]
    %s56 = scalar_lea.vmem %s0, 30
    %v57 = vld [vmem:[%s56] ss:$8 sm:$0x7]
    %v58 = vadd.f32 %v52, %v55
    %v59 = vadd.f32 %v53, %v57
    %s60 = scalar_lea.vmem %s0, 7
    %v61 = vld [vmem:[%s60] ss:$8 sm:$0x7]
    %s62 = scalar_lea.vmem %s0, 31
    %v63 = vld [vmem:[%s62] ss:$8 sm:$0x7]
    %v64 = vadd.f32 %v58, %v61
    %v65 = vadd.f32 %v59, %v63
    %v66 = vld [vmem:[%s1] sm:$0xff]
    %v67 = vld [vmem:[%s1 + $0x8] sm:$0xff]
    %v68 = vld [vmem:[%s1 + $0x10] sm:$0xff]
    %v69 = vld [vmem:[%s1 + $0x18] sm:$0xff]
    %v70 = vld [vmem:[%s1 + $0x20] sm:$0xff]
    %v71 = vld [vmem:[%s1 + $0x28] sm:$0xff]
    %v72 = vld [vmem:[%s1 + $0x30] sm:$0xff]
    %v73 = vld [vmem:[%s1 + $0x38] sm:$0xff]
    %v74 = vld [vmem:[%s1 + $0x40] sm:$0xff]
    %v75 = vld [vmem:[%s1 + $0x48] sm:$0xff]
    %v76 = vld [vmem:[%s1 + $0x50] sm:$0xff]
    %v77 = vld [vmem:[%s1 + $0x58] sm:$0xff]
    %v78 = vld [vmem:[%s1 + $0x60] sm:$0xff]
    %v79 = vld [vmem:[%s1 + $0x68] sm:$0xff]
    %v80 = vld [vmem:[%s1 + $0x70] sm:$0xff]
    %v81 = vld [vmem:[%s1 + $0x78] sm:$0xff]
    %v82 = vld [vmem:[%s1 + $0x80] sm:$0xff]
    %v83 = vld [vmem:[%s1 + $0x88] sm:$0xff]
    %v84 = vld [vmem:[%s1 + $0x90] sm:$0xff]
    %v85 = vld [vmem:[%s1 + $0x98] sm:$0xff]
    %v86 = vld [vmem:[%s1 + $0xa0] sm:$0xff]
    %v87 = vld [vmem:[%s1 + $0xa8] sm:$0xff]
    %v88 = vld [vmem:[%s1 + $0xb0] sm:$0xff]
    %v89 = vld [vmem:[%s1 + $0xb8] sm:$0xff]
    %v90 = vld [vmem:[%s1 + $0xc0] sm:$0xff]
    %v91 = vld [vmem:[%s1 + $0xc8] sm:$0xff]
    %v92 = vld [vmem:[%s1 + $0xd0] sm:$0xff]
    %v93 = vld [vmem:[%s1 + $0xd8] sm:$0xff]
    %v94 = vld [vmem:[%s1 + $0xe0] sm:$0xff]
    %v95 = vld [vmem:[%s1 + $0xe8] sm:$0xff]
    %v96 = vld [vmem:[%s1 + $0xf0] sm:$0xff]
    %v97 = vld [vmem:[%s1 + $0xf8] sm:$0xff]
    %v98 = vld [vmem:[%s1 + $0x100] sm:$0xff]
    %v99 = vld [vmem:[%s1 + $0x108] sm:$0xff]
    %v100 = vld [vmem:[%s1 + $0x110] sm:$0xff]
    %v101 = vld [vmem:[%s1 + $0x118] sm:$0xff]
    %v102 = vld [vmem:[%s1 + $0x120] sm:$0xff]
    %v103 = vld [vmem:[%s1 + $0x128] sm:$0xf]
    %v104 = vld [vmem:[%s2] sm:$0x1]
    %v106 = vlaneseq
    %v107 = vshrl.u32 %v106, 7
    %v108 = vsub.s32 0, %v107
    %v109 = vrot.slane %v104, %v108
    %v113 = vcombine.low %v64, %v65
    %v115 = vunpack.c.l.s4 1966171168
    %v116 = vunpack.c.0.s8 %v115
    %v117 = vlaneseq
    %v118 = vshrl.u32 %v117, 7
    %v119 = vsub.s32 %v116, %v118
    %v120 = vrot.slane %v113, %v119
    %v121 = vcombine.high %v120, %v120
    %v123 = vunpack.c.l.s4 1966171168
    %v124 = vunpack.c.0.s8 %v123
    %v125 = vlaneseq
    %v126 = vshrl.u32 %v125, 7
    %v127 = vsub.s32 %v124, %v126
    %v128 = vrot.slane %v120, %v127
    %v130 = vunpack.c.l.s4 1966171168
    %v131 = vunpack.c.0.s8 %v130
    %v132 = vlaneseq
    %v133 = vshrl.u32 %v132, 7
    %v134 = vsub.s32 %v131, %v133
    %v135 = vrot.slane %v121, %v134
    %v136 = vcombine.high %v128, %v128
    %vm139 = vcmask 359424
    %v140 = vsel %vm139, %v136, 0
    %vm142 = vcmask 1043456
    %v144 = vsel %vm142, %v103, 0
    %146 = vmatprep.subr.mxu0 0.0
    %147 = vmatpush1.msra.mxu0 %v66
    %148 = vmatprep.subr.mxu0 0.0
    %149 = vmatpush1.msra.mxu0 %v67
    %150 = vmatprep.subr.mxu0 0.0
    %151 = vmatpush1.msra.mxu0 %v68
    %152 = vmatprep.subr.mxu0 0.0
    %153 = vmatpush1.msra.mxu0 %v69
    %154 = vmatprep.subr.mxu0 0.0
    %155 = vmatpush1.msra.mxu0 %v70
    %156 = vmatprep.subr.mxu0 0.0
    %157 = vmatpush1.msra.mxu0 %v71
    %158 = vmatprep.subr.mxu0 0.0
    %159 = vmatpush1.msra.mxu0 %v72
    %160 = vmatprep.subr.mxu0 0.0
    %161 = vmatpush1.msra.mxu0 %v73
    %162 = vmatprep.subr.mxu0 0.0
    %163 = vmatpush1.msra.mxu0 %v74
    %164 = vmatprep.subr.mxu0 0.0
    %165 = vmatpush1.msra.mxu0 %v75
    %166 = vmatprep.subr.mxu0 0.0
    %167 = vmatpush1.msra.mxu0 %v76
    %168 = vmatprep.subr.mxu0 0.0
    %169 = vmatpush1.msra.mxu0 %v77
    %170 = vmatprep.subr.mxu0 0.0
    %171 = vmatpush1.msra.mxu0 %v78
    %172 = vmatprep.subr.mxu0 0.0
    %173 = vmatpush1.msra.mxu0 %v79
    %174 = vmatprep.subr.mxu0 0.0
    %175 = vmatpush1.msra.mxu0 %v80
    %176 = vmatprep.subr.mxu0 0.0
    %177 = vmatpush1.msra.mxu0 %v81
    %178 = vmatprep.subr.mxu0 0.0
    %179 = vmatpush1.msra.mxu0 %v82
    %180 = vmatprep.subr.mxu0 0.0
    %181 = vmatpush1.msra.mxu0 %v83
    %182 = vmatprep.subr.mxu0 0.0
    %183 = vmatpush1.msra.mxu0 %v84
    %184 = vmatprep.subr.mxu0 0.0
    %185 = vmatpush1.msra.mxu0 %v85
    %186 = vmatprep.subr.mxu0 0.0
    %187 = vmatpush1.msra.mxu0 %v86
    %188 = vmatprep.subr.mxu0 0.0
    %189 = vmatpush1.msra.mxu0 %v87
    %190 = vmatprep.subr.mxu0 0.0
    %191 = vmatpush1.msra.mxu0 %v88
    %192 = vmatprep.subr.mxu0 0.0
    %193 = vmatpush1.msra.mxu0 %v89
    %194 = vmatprep.subr.mxu0 0.0
    %195 = vmatpush1.msra.mxu0 %v90
    %196 = vmatprep.subr.mxu0 0.0
    %197 = vmatpush1.msra.mxu0 %v91
    %198 = vmatprep.subr.mxu0 0.0
    %199 = vmatpush1.msra.mxu0 %v92
    %200 = vmatprep.subr.mxu0 0.0
    %201 = vmatpush1.msra.mxu0 %v93
    %202 = vmatprep.subr.mxu0 0.0
    %203 = vmatpush1.msra.mxu0 %v94
    %204 = vmatprep.subr.mxu0 0.0
    %205 = vmatpush1.msra.mxu0 %v95
    %206 = vmatprep.subr.mxu0 0.0
    %207 = vmatpush1.msra.mxu0 %v96
    %208 = vmatprep.subr.mxu0 0.0
    %209 = vmatpush1.msra.mxu0 %v97
    %210 = vmatprep.mubr.f32.mxu0 %v135
    %211 = vmatmul.mubr.f32.gmra.mrb[0].mxu0 %v128
    %v212 = vpop.f32.mrb[0].mxu0
    %v213 = vadd.f32 %v109, %v212
    %v214 = vpop.f32.mrb[0].mxu0
    %215 = vdwg.mxu0
    %216 = vmatprep.subr.mxu0 0.0
    %217 = vmatpush1.msra.mxu0 %v98
    %218 = vmatprep.subr.mxu0 0.0
    %219 = vmatpush1.msra.mxu0 %v99
    %220 = vmatprep.subr.mxu0 0.0
    %221 = vmatpush1.msra.mxu0 %v100
    %222 = vmatprep.subr.mxu0 0.0
    %223 = vmatpush1.msra.mxu0 %v101
    %224 = vmatprep.subr.mxu0 0.0
    %225 = vmatpush1.msra.mxu0 %v102
    %226 = vmatprep.subr.mxu0 0.0
    %227 = vmatpush1.msra.mxu0 %v144
    %228 = vmatprep.subr.mxu0 0.0
    %229 = vmatpush1.msra.mxu0 0.0
    %230 = vmatprep.subr.mxu0 0.0
    %231 = vmatpush1.msra.mxu0 0.0
    %232 = vmatprep.subr.mxu0 0.0
    %233 = vmatpush1.msra.mxu0 0.0
    %234 = vmatprep.subr.mxu0 0.0
    %235 = vmatpush1.msra.mxu0 0.0
    %236 = vmatprep.subr.mxu0 0.0
    %237 = vmatpush1.msra.mxu0 0.0
    %238 = vmatprep.subr.mxu0 0.0
    %239 = vmatpush1.msra.mxu0 0.0
    %240 = vmatprep.subr.mxu0 0.0
    %241 = vmatpush1.msra.mxu0 0.0
    %242 = vmatprep.subr.mxu0 0.0
    %243 = vmatpush1.msra.mxu0 0.0
    %244 = vmatprep.subr.mxu0 0.0
    %245 = vmatpush1.msra.mxu0 0.0
    %246 = vmatprep.subr.mxu0 0.0
    %247 = vmatpush1.msra.mxu0 0.0
    %248 = vmatprep.subr.mxu0 0.0
    %249 = vmatpush1.msra.mxu0 0.0
    %250 = vmatprep.subr.mxu0 0.0
    %251 = vmatpush1.msra.mxu0 0.0
    %252 = vmatprep.subr.mxu0 0.0
    %253 = vmatpush1.msra.mxu0 0.0
    %254 = vmatprep.subr.mxu0 0.0
    %255 = vmatpush1.msra.mxu0 0.0
    %256 = vmatprep.subr.mxu0 0.0
    %257 = vmatpush1.msra.mxu0 0.0
    %258 = vmatprep.subr.mxu0 0.0
    %259 = vmatpush1.msra.mxu0 0.0
    %260 = vmatprep.subr.mxu0 0.0
    %261 = vmatpush1.msra.mxu0 0.0
    %262 = vmatprep.subr.mxu0 0.0
    %263 = vmatpush1.msra.mxu0 0.0
    %264 = vmatprep.subr.mxu0 0.0
    %265 = vmatpush1.msra.mxu0 0.0
    %266 = vmatprep.subr.mxu0 0.0
    %267 = vmatpush1.msra.mxu0 0.0
    %268 = vmatprep.subr.mxu0 0.0
    %269 = vmatpush1.msra.mxu0 0.0
    %270 = vmatprep.subr.mxu0 0.0
    %271 = vmatpush1.msra.mxu0 0.0
    %272 = vmatprep.subr.mxu0 0.0
    %273 = vmatpush1.msra.mxu0 0.0
    %274 = vmatprep.subr.mxu0 0.0
    %275 = vmatpush1.msra.mxu0 0.0
    %276 = vmatprep.subr.mxu0 0.0
    %277 = vmatpush1.msra.mxu0 0.0
    %278 = vmatprep.subr.mxu0 0.0
    %279 = vmatpush1.msra.mxu0 0.0
    %280 = vmatprep.mubr.f32.mxu0 0.0
    %281 = vmatmul.mubr.f32.gmra.mrb[0].mxu0 %v140
    %v282 = vpop.f32.mrb[0].mxu0
    %v283 = vadd.f32 %v213, %v282
    %v284 = vpop.f32.mrb[0].mxu0
    %285 = vdwg.mxu0
    %v286 = vmax.f32 %v283, 0.0
    %v287 = vld [vmem:[%s3] sm:$0x3]
    %v288 = vld [vmem:[%s4] sm:$0x1]
    %v289 = vlaneseq
    %v290 = vshrl.u32 %v289, 7
    %v291 = vsub.s32 0, %v290
    %v292 = vrot.slane %v287, %v291
    %v293 = vmul.f32 %v286, %v292
    %vm294 = vcmask 74752
    %v295 = vsel %vm294, %v293, 0.0
    %296 = vadd.xlane.f32.xlu0 %v295
    %v297 = vpop.xlane.xlu0 %296
    %v299 = vlaneseq
    %v300 = vshrl.u32 %v299, 7
    %v301 = vsub.s32 0, %v300
    %v302 = vrot.slane %v288, %v301
    %v304 = vadd.f32 %v297, %v302
    %vm305 = vcmask 1024
    %306 = vst.msk [vmem:[#allocation2] sm:$0x3] %vm305, %v304
    %v307 = vlaneseq
    %v308 = vshrl.u32 %v307, 7
    %v309 = vsub.s32 1, %v308
    %v310 = vrot.slane %v287, %v309
    %v311 = vmul.f32 %v286, %v310
    %v312 = vsel %vm294, %v311, 0.0
    %313 = vadd.xlane.f32.xlu0 %v312
    %v314 = vpop.xlane.xlu0 %313
    %v315 = vadd.f32 %v314, %v302
    %vm316 = vcmask 9224
    %317 = vst.msk [vmem:[#allocation2] sm:$0x3] %vm316, %v315
    // Predicated region
    $region22: #{tpu_custom_call.1} parent=1 // pred_check
      _
    $region23: #{tpu_custom_call.1} parent=1 // pred_check_branch
      %319 = sbr.rel (0) target = $region25
    $region24: #{tpu_custom_call.1} parent=1 // pred_region
      %s321 = ssub.s32 32, 32
      %322 = vsyncadd [#allocation3], %s321
      %s324 = sshll.u32 [#allocation2], 4
      %s325 = int_to_ptr.vmem [resolvable:$true] %s324
      %327 = dma.vmem_to_hbm [thread:$0]  %s325, 32, %s5, [#allocation3]
    $region25: #{tpu_custom_call.1} parent=1 // pred_fallthru
      _
    // Predicated region
    $region26: #{tpu_custom_call.1} parent=1 // pred_check
      _
    $region27: #{tpu_custom_call.1} parent=1 // pred_check_branch
      %329 = sbr.rel (0) target = $region29
    $region28: #{tpu_custom_call.1} parent=1 // pred_region
      %330 = dma.done [#allocation3], 32
    $region29: #{tpu_custom_call.1} parent=1 // pred_fallthru
      _
    %331 = vsyncpa [#allocation3], 1

</llo_original>
